<compile_context>
chip_gen: v5e
topology: v5e:2x2
jax: 0.10.0
libtpu: 0.0.40
codegen_flags: <defaults>
</compile_context>

<pallas_src>
import functools

import jax
import jax.numpy as jnp
from jax.experimental import pallas as pl
from jax.experimental.pallas import tpu as pltpu

LOG_STD_MAX = 2.0
LOG_STD_MIN = -20.0


def _round_up(x, m):
    return (x + m - 1) // m * m


def actor_kernel(obs_ref, w1_ref, b1_ref, w2_ref, b2_ref,
                 w34_ref, b34_ref, bound2_ref, out_ref, *, act_dim):
    # Matmul-input dtype follows the weights (f32 or bf16); accumulation,
    # bias adds and all transcendentals stay in f32.
    cdt = w1_ref.dtype
    obs = obs_ref[...].astype(cdt)

    # h = tanh(ln1(obs))
    h = jnp.tanh(
        jnp.dot(obs, w1_ref[...], preferred_element_type=jnp.float32)
        + b1_ref[...]
    )
    # h = tanh(ln2(h))
    h = jnp.tanh(
        jnp.dot(h.astype(cdt), w2_ref[...], preferred_element_type=jnp.float32)
        + b2_ref[...]
    )

    # Fused head: one matmul producing [ln3 | ln4] on the lane axis.
    head = (
        jnp.dot(h.astype(cdt), w34_ref[...], preferred_element_type=jnp.float32)
        + b34_ref[...]
    )

    # First act_dim lanes -> action_bound * tanh(.)
    # Last  act_dim lanes -> exp(clip(., LOG_STD_MIN, LOG_STD_MAX))
    mean_full = bound2_ref[...] * jnp.tanh(head)
    std_full = jnp.exp(jnp.clip(head, LOG_STD_MIN, LOG_STD_MAX))
    lane = jax.lax.broadcasted_iota(jnp.int32, head.shape, dimension=1)
    out_ref[...] = jnp.where(lane < act_dim, mean_full, std_full)


def actor_forward(obs, params, action_bound, *, batch_tile=512,
                  compute_dtype=jnp.float32):
    """Full Actor MLP in one pallas_call, gridded over the batch dimension."""
    obs = jnp.asarray(obs, jnp.float32)
    B, obs_dim = obs.shape
    act_dim = params["w3"].shape[1]

    # --- head fusion: [w3 | w4], [b3 | b4] ------------------------------
    w34 = jnp.concatenate([params["w3"], params["w4"]], axis=1)
    b34 = jnp.concatenate([params["b3"], params["b4"]], axis=1)
    bound = jnp.asarray(action_bound, jnp.float32).reshape(1, act_dim)
    bound2 = jnp.concatenate([bound, jnp.ones_like(bound)], axis=1)

    # --- matmul-input dtype (bf16 on v6e/v7x halves weight traffic) -----
    w1 = params["w1"].astype(compute_dtype)
    w2 = params["w2"].astype(compute_dtype)
    w34 = w34.astype(compute_dtype)
    b1, b2 = params["b1"], params["b2"]          # stay f32

    # --- batch tiling: pad B up to a multiple of the tile ---------------
    tb = min(batch_tile, _round_up(B, 8))
    b_pad = _round_up(B, tb)
    if b_pad != B:
        obs = jnp.pad(obs, ((0, b_pad - B), (0, 0)))
    grid = (b_pad // tb,)

    def row_spec(feat):
        return pl.BlockSpec((tb, feat), lambda i: (i, 0))

    def const_spec(arr):
        return pl.BlockSpec(arr.shape, lambda i: (0, 0))

    fused = pl.pallas_call(
        functools.partial(actor_kernel, act_dim=act_dim),
        out_shape=jax.ShapeDtypeStruct((b_pad, 2 * act_dim), jnp.float32),
        grid=grid,
        in_specs=[
            row_spec(obs_dim),
            const_spec(w1), const_spec(b1),
            const_spec(w2), const_spec(b2),
            const_spec(w34), const_spec(b34),
            const_spec(bound2),
        ],
        out_specs=row_spec(2 * act_dim),
        compiler_params=pltpu.CompilerParams(
            dimension_semantics=("parallel",),
            vmem_limit_bytes=32 * 1024 * 1024,
        ),
    )(obs, w1, b1, w2, b2, w34, b34, bound2)

    act_mean = fused[:B, :act_dim]
    act_std = fused[:B, act_dim:]
    return act_mean, act_std


def init_params(key, obs_dim, act_dim, hidden_dim):
    ks = jax.random.split(key, 8)
    scale = 0.1

    def lin(kw, kb, fan_in, fan_out):
        w = scale * jax.random.normal(kw, (fan_in, fan_out), jnp.float32)
        b = scale * jax.random.normal(kb, (1, fan_out), jnp.float32)
        return w, b

    w1, b1 = lin(ks[0], ks[1], obs_dim, hidden_dim)
    w2, b2 = lin(ks[2], ks[3], hidden_dim, hidden_dim)
    w3, b3 = lin(ks[4], ks[5], hidden_dim, act_dim)
    w4, b4 = lin(ks[6], ks[7], hidden_dim, act_dim)
    return dict(w1=w1, b1=b1, w2=w2, b2=b2, w3=w3, b3=b3, w4=w4, b4=b4)


def reference_forward(obs, params, action_bound):
    """Plain-JAX reference replicating the PyTorch forward."""
    h = jnp.tanh(obs @ params["w1"] + params["b1"])
    h = jnp.tanh(h @ params["w2"] + params["b2"])
    mean = action_bound * jnp.tanh(h @ params["w3"] + params["b3"])
    log_std = jnp.clip(h @ params["w4"] + params["b4"], LOG_STD_MIN, LOG_STD_MAX)
    return mean, jnp.exp(log_std)


if __name__ == "__main__":
    obs_dim, act_dim, hidden_dim = 16, 4, 32
    batch = 8

    key = jax.random.PRNGKey(0)
    k_obs, k_params, k_obs2 = jax.random.split(key, 3)

    obs = jax.random.normal(k_obs, (batch, obs_dim), jnp.float32)
    params = init_params(k_params, obs_dim, act_dim, hidden_dim)
    action_bound = jnp.full((1, act_dim), 2.0, dtype=jnp.float32)

    # f32 path, tiny batch.
    act_mean, act_std = actor_forward(obs, params, action_bound)
    jax.block_until_ready((act_mean, act_std))
    ref_mean, ref_std = reference_forward(obs, params, action_bound)
    assert act_mean.shape == (batch, act_dim)
    assert act_std.shape == (batch, act_dim)
    assert jnp.allclose(act_mean, ref_mean, atol=1e-5, rtol=1e-5)
    assert jnp.allclose(act_std, ref_std, atol=1e-5, rtol=1e-5)

    # bf16-matmul path on a batch that exercises padding + the grid.
    batch2 = 50
    obs2 = jax.random.normal(k_obs2, (batch2, obs_dim), jnp.float32)
    m2, s2 = actor_forward(obs2, params, action_bound,
                           compute_dtype=jnp.bfloat16)
    jax.block_until_ready((m2, s2))
    rm2, rs2 = reference_forward(obs2, params, action_bound)
    assert m2.shape == (batch2, act_dim) and s2.shape == (batch2, act_dim)
    assert jnp.allclose(m2, rm2, atol=2e-1, rtol=1e-1)
    assert jnp.allclose(s2, rs2, atol=2e-1, rtol=1e-1)

    print("KERNEL_OK")
</pallas_src>

<mosaic_0001>
module attributes {stable_mosaic.version = 11 : i64} {
  func.func @actor_kernel(%arg0: i32, %arg1: memref<8x16xf32, #tpu.memory_space<vmem>>, %arg2: memref<16x32xf32, #tpu.memory_space<vmem>>, %arg3: memref<1x32xf32, #tpu.memory_space<vmem>>, %arg4: memref<32x32xf32, #tpu.memory_space<vmem>>, %arg5: memref<1x32xf32, #tpu.memory_space<vmem>>, %arg6: memref<32x8xf32, #tpu.memory_space<vmem>>, %arg7: memref<1x8xf32, #tpu.memory_space<vmem>>, %arg8: memref<1x8xf32, #tpu.memory_space<vmem>>, %arg9: memref<8x8xf32, #tpu.memory_space<vmem>>) attributes {dimension_semantics = [#tpu.dimension_semantics<parallel>], iteration_bounds = array<i64: 1>, scalar_prefetch = 0 : i64, scratch_operands = 0 : i64, tpu.core_type = #tpu.core_type<tc>, window_params = [{transform_indices = @transform_0, window_bounds = array<i64: 8, 16>}, {pipeline_mode = #tpu.pipeline_mode<synchronous>, transform_indices = @transform_1, window_bounds = array<i64: 16, 32>}, {pipeline_mode = #tpu.pipeline_mode<synchronous>, transform_indices = @transform_2, window_bounds = array<i64: 1, 32>}, {pipeline_mode = #tpu.pipeline_mode<synchronous>, transform_indices = @transform_3, window_bounds = array<i64: 32, 32>}, {pipeline_mode = #tpu.pipeline_mode<synchronous>, transform_indices = @transform_4, window_bounds = array<i64: 1, 32>}, {pipeline_mode = #tpu.pipeline_mode<synchronous>, transform_indices = @transform_5, window_bounds = array<i64: 32, 8>}, {pipeline_mode = #tpu.pipeline_mode<synchronous>, transform_indices = @transform_6, window_bounds = array<i64: 1, 8>}, {pipeline_mode = #tpu.pipeline_mode<synchronous>, transform_indices = @transform_7, window_bounds = array<i64: 1, 8>}, {transform_indices = @transform_8, window_bounds = array<i64: 8, 8>}]} {
    %c0 = arith.constant 0 : index
    %c0_0 = arith.constant 0 : index
    %0 = vector.load %arg1[%c0, %c0_0] : memref<8x16xf32, #tpu.memory_space<vmem>>, vector<8x16xf32>
    %c0_1 = arith.constant 0 : index
    %c0_2 = arith.constant 0 : index
    %1 = vector.load %arg2[%c0_1, %c0_2] : memref<16x32xf32, #tpu.memory_space<vmem>>, vector<16x32xf32>
    %cst = arith.constant dense<0.000000e+00> : vector<8x32xf32>
    %2 = tpu.matmul %0, %1, %cst {dimension_numbers = #tpu.dot_dimension_numbers<[1], [0], [0], [1], [0, 0, 1, 1], [], []>} : vector<8x16xf32>, vector<16x32xf32>, vector<8x32xf32> -> vector<8x32xf32>
    %c0_3 = arith.constant 0 : index
    %c0_4 = arith.constant 0 : index
    %3 = vector.load %arg3[%c0_3, %c0_4] : memref<1x32xf32, #tpu.memory_space<vmem>>, vector<1x32xf32>
    %4 = vector.broadcast %3 : vector<1x32xf32> to vector<8x32xf32>
    %5 = arith.addf %2, %4 : vector<8x32xf32>
    %6 = math.tanh %5 : vector<8x32xf32>
    %c0_5 = arith.constant 0 : index
    %c0_6 = arith.constant 0 : index
    %7 = vector.load %arg4[%c0_5, %c0_6] : memref<32x32xf32, #tpu.memory_space<vmem>>, vector<32x32xf32>
    %cst_7 = arith.constant dense<0.000000e+00> : vector<8x32xf32>
    %8 = tpu.matmul %6, %7, %cst_7 {dimension_numbers = #tpu.dot_dimension_numbers<[1], [0], [0], [1], [0, 0, 1, 1], [], []>} : vector<8x32xf32>, vector<32x32xf32>, vector<8x32xf32> -> vector<8x32xf32>
    %c0_8 = arith.constant 0 : index
    %c0_9 = arith.constant 0 : index
    %9 = vector.load %arg5[%c0_8, %c0_9] : memref<1x32xf32, #tpu.memory_space<vmem>>, vector<1x32xf32>
    %10 = vector.broadcast %9 : vector<1x32xf32> to vector<8x32xf32>
    %11 = arith.addf %8, %10 : vector<8x32xf32>
    %12 = math.tanh %11 : vector<8x32xf32>
    %c0_10 = arith.constant 0 : index
    %c0_11 = arith.constant 0 : index
    %13 = vector.load %arg6[%c0_10, %c0_11] : memref<32x8xf32, #tpu.memory_space<vmem>>, vector<32x8xf32>
    %cst_12 = arith.constant dense<0.000000e+00> : vector<8x8xf32>
    %14 = tpu.matmul %12, %13, %cst_12 {dimension_numbers = #tpu.dot_dimension_numbers<[1], [0], [0], [1], [0, 0, 1, 1], [], []>} : vector<8x32xf32>, vector<32x8xf32>, vector<8x8xf32> -> vector<8x8xf32>
    %c0_13 = arith.constant 0 : index
    %c0_14 = arith.constant 0 : index
    %15 = vector.load %arg7[%c0_13, %c0_14] : memref<1x8xf32, #tpu.memory_space<vmem>>, vector<1x8xf32>
    %16 = vector.broadcast %15 : vector<1x8xf32> to vector<8x8xf32>
    %17 = arith.addf %14, %16 : vector<8x8xf32>
    %c0_15 = arith.constant 0 : index
    %c0_16 = arith.constant 0 : index
    %18 = vector.load %arg8[%c0_15, %c0_16] : memref<1x8xf32, #tpu.memory_space<vmem>>, vector<1x8xf32>
    %19 = math.tanh %17 : vector<8x8xf32>
    %20 = vector.broadcast %18 : vector<1x8xf32> to vector<8x8xf32>
    %21 = arith.mulf %20, %19 : vector<8x8xf32>
    %cst_17 = arith.constant -2.000000e+01 : f32
    %cst_18 = arith.constant 2.000000e+00 : f32
    %22 = vector.broadcast %cst_17 : f32 to vector<8x8xf32>
    %23 = arith.maximumf %22, %17 : vector<8x8xf32>
    %24 = vector.broadcast %cst_18 : f32 to vector<8x8xf32>
    %25 = arith.minimumf %24, %23 : vector<8x8xf32>
    %26 = math.exp %25 : vector<8x8xf32>
    %27 = tpu.iota {dimensions = array<i32: 1>} : vector<8x8xi32>
    %c4_i32 = arith.constant 4 : i32
    %28 = vector.broadcast %c4_i32 : i32 to vector<8x8xi32>
    %29 = arith.cmpi slt, %27, %28 : vector<8x8xi32>
    %30 = arith.select %29, %21, %26 : vector<8x8xi1>, vector<8x8xf32>
    %c0_19 = arith.constant 0 : index
    %c0_20 = arith.constant 0 : index
    %31 = vector.load %arg9[%c0_19, %c0_20] : memref<8x8xf32, #tpu.memory_space<vmem>>, vector<8x8xf32>
    tpu.vector_store %arg9[%c0_19, %c0_20], %30 {strides = array<i32>} : memref<8x8xf32, #tpu.memory_space<vmem>>, vector<8x8xf32>,
    return
  }
  func.func @transform_0(%arg0: i32) -> (i32, i32) {
    %c0_i32 = arith.constant 0 : i32
    %c0_i32_0 = arith.constant 0 : i32
    return %arg0, %c0_i32 : i32, i32
  }
  func.func @transform_1(%arg0: i32) -> (i32, i32) {
    %c0_i32 = arith.constant 0 : i32
    %c0_i32_0 = arith.constant 0 : i32
    %c0_i32_1 = arith.constant 0 : i32
    return %c0_i32, %c0_i32_0 : i32, i32
  }
  func.func @transform_2(%arg0: i32) -> (i32, i32) {
    %c0_i32 = arith.constant 0 : i32
    %c0_i32_0 = arith.constant 0 : i32
    %c0_i32_1 = arith.constant 0 : i32
    return %c0_i32, %c0_i32_0 : i32, i32
  }
  func.func @transform_3(%arg0: i32) -> (i32, i32) {
    %c0_i32 = arith.constant 0 : i32
    %c0_i32_0 = arith.constant 0 : i32
    %c0_i32_1 = arith.constant 0 : i32
    return %c0_i32, %c0_i32_0 : i32, i32
  }
  func.func @transform_4(%arg0: i32) -> (i32, i32) {
    %c0_i32 = arith.constant 0 : i32
    %c0_i32_0 = arith.constant 0 : i32
    %c0_i32_1 = arith.constant 0 : i32
    return %c0_i32, %c0_i32_0 : i32, i32
  }
  func.func @transform_5(%arg0: i32) -> (i32, i32) {
    %c0_i32 = arith.constant 0 : i32
    %c0_i32_0 = arith.constant 0 : i32
    %c0_i32_1 = arith.constant 0 : i32
    return %c0_i32, %c0_i32_0 : i32, i32
  }
  func.func @transform_6(%arg0: i32) -> (i32, i32) {
    %c0_i32 = arith.constant 0 : i32
    %c0_i32_0 = arith.constant 0 : i32
    %c0_i32_1 = arith.constant 0 : i32
    return %c0_i32, %c0_i32_0 : i32, i32
  }
  func.func @transform_7(%arg0: i32) -> (i32, i32) {
    %c0_i32 = arith.constant 0 : i32
    %c0_i32_0 = arith.constant 0 : i32
    %c0_i32_1 = arith.constant 0 : i32
    return %c0_i32, %c0_i32_0 : i32, i32
  }
  func.func @transform_8(%arg0: i32) -> (i32, i32) {
    %c0_i32 = arith.constant 0 : i32
    %c0_i32_0 = arith.constant 0 : i32
    return %arg0, %c0_i32 : i32, i32
  }
}

</mosaic_0001>

<llo_original>
// kernel: tpu_custom_call.1
$region0: #{tpu_custom_call.1}
  #allocation0 [shape = 'u32[]', space=smem, size = 0x4, offset = 0x4, fixed_abs, tag = 'smem constant byte address 0x4 - core index']
  #allocation1 [shape = 'u32[72,128]{1,0:T(1,128)}', space=vmem, size = 0x9000, scoped, tag = 'internal scratch']
  %s0 = inlined_call_operand.vmem [shape: f32[8,16], index: 0, kind: input, shape index: {}]
  %s1 = inlined_call_operand.hbm [shape: f32[16,32], index: 1, kind: input, shape index: {}]
  %s2 = inlined_call_operand.vmem [shape: f32[1,32], index: 2, kind: input, shape index: {}]
  %s3 = inlined_call_operand.vmem [shape: f32[32,32], index: 3, kind: input, shape index: {}]
  %s4 = inlined_call_operand.vmem [shape: f32[1,32], index: 4, kind: input, shape index: {}]
  %s5 = inlined_call_operand.vmem [shape: f32[32,8], index: 5, kind: input, shape index: {}]
  %s6 = inlined_call_operand.vmem [shape: f32[1,8], index: 6, kind: input, shape index: {}]
  %s7 = inlined_call_operand.vmem [shape: f32[1,8], index: 7, kind: input, shape index: {}]
  %s8 = inlined_call_operand.hbm [shape: f32[8,8], index: 8, kind: output, shape index: {}]
  %s9 = sld [smem:[#allocation0]]
  $region46: #{tpu_custom_call.1} parent=0
    _
  %s11 = ssub.s32 1, %s9
  %s12 = scalar_select 0, %s11, %s9
  $region1: #{tpu_custom_call.1} parent=0
    #allocation2 [shape = 'u8[8192]{0}', space=vmem, size = 0x2000, scoped, tag = 'input window, operand 1, single buffered']
    #allocation3 [shape = 's32[1]{0}', space=sflag, size = 0x4, scoped, tag = 'scoped memory for tpu_custom_call.1']
    #allocation4 [shape = 's32[1]{0}', space=sflag, size = 0x4, scoped, tag = 'scoped memory for tpu_custom_call.1']
    #allocation5 [shape = 'u8[4096]{0}', space=vmem, size = 0x1000, scoped, tag = 'output window, operand 0, single buffered']
    %13 = vsyncpa [#allocation3], 0
    %14 = vsyncpa [#allocation4], 0
    // Predicated region
    $region2: #{tpu_custom_call.1} parent=1 // pred_check
      _
    $region3: #{tpu_custom_call.1} parent=1 // pred_check_branch
      %16 = sbr.rel (0) target = $region5
    $region4: #{tpu_custom_call.1} parent=1 // pred_region
      _
    $region5: #{tpu_custom_call.1} parent=1 // pred_fallthru
      _
    // Predicated region
    $region6: #{tpu_custom_call.1} parent=1 // pred_check
      _
    $region7: #{tpu_custom_call.1} parent=1 // pred_check_branch
      %18 = sbr.rel (0) target = $region9
    $region8: #{tpu_custom_call.1} parent=1 // pred_region
      %20 = vsyncadd [#allocation3], 0
      %s21 = sshll.u32 %s1, 4
      %s22 = int_to_ptr.hbm [resolvable:$true] %s21
      %s23 = sshll.u32 [#allocation2], 4
      %s24 = int_to_ptr.vmem [resolvable:$true] %s23
      %29 = dma.hbm_to_vmem [thread:$0]  %s22, 256, %s24, [#allocation3], 128, 128, 8
    $region9: #{tpu_custom_call.1} parent=1 // pred_fallthru
      _
    // Predicated region
    $region10: #{tpu_custom_call.1} parent=1 // pred_check
      _
    $region11: #{tpu_custom_call.1} parent=1 // pred_check_branch
      %31 = sbr.rel (0) target = $region13
    $region12: #{tpu_custom_call.1} parent=1 // pred_region
      _
    $region13: #{tpu_custom_call.1} parent=1 // pred_fallthru
      _
    // Predicated region
    $region14: #{tpu_custom_call.1} parent=1 // pred_check
      _
    $region15: #{tpu_custom_call.1} parent=1 // pred_check_branch
      %33 = sbr.rel (0) target = $region17
    $region16: #{tpu_custom_call.1} parent=1 // pred_region
      _
    $region17: #{tpu_custom_call.1} parent=1 // pred_fallthru
      _
    // Predicated region
    $region18: #{tpu_custom_call.1} parent=1 // pred_check
      _
    $region19: #{tpu_custom_call.1} parent=1 // pred_check_branch
      %35 = sbr.rel (0) target = $region21
    $region20: #{tpu_custom_call.1} parent=1 // pred_region
      _
    $region21: #{tpu_custom_call.1} parent=1 // pred_fallthru
      _
    // Predicated region
    $region22: #{tpu_custom_call.1} parent=1 // pred_check
      _
    $region23: #{tpu_custom_call.1} parent=1 // pred_check_branch
      %37 = sbr.rel (0) target = $region25
    $region24: #{tpu_custom_call.1} parent=1 // pred_region
      _
    $region25: #{tpu_custom_call.1} parent=1 // pred_fallthru
      _
    // Predicated region
    $region26: #{tpu_custom_call.1} parent=1 // pred_check
      _
    $region27: #{tpu_custom_call.1} parent=1 // pred_check_branch
      %39 = sbr.rel (0) target = $region29
    $region28: #{tpu_custom_call.1} parent=1 // pred_region
      _
    $region29: #{tpu_custom_call.1} parent=1 // pred_fallthru
      _
    // Predicated region
    $region30: #{tpu_custom_call.1} parent=1 // pred_check
      _
    $region31: #{tpu_custom_call.1} parent=1 // pred_check_branch
      %41 = sbr.rel (0) target = $region33
    $region32: #{tpu_custom_call.1} parent=1 // pred_region
      _
    $region33: #{tpu_custom_call.1} parent=1 // pred_fallthru
      _
    // Predicated region
    $region34: #{tpu_custom_call.1} parent=1 // pred_check
      _
    $region35: #{tpu_custom_call.1} parent=1 // pred_check_branch
      %43 = sbr.rel (0) target = $region37
    $region36: #{tpu_custom_call.1} parent=1 // pred_region
      %45 = dma.done [#allocation3], 256
    $region37: #{tpu_custom_call.1} parent=1 // pred_fallthru
      _
    %v46 = vld [vmem:[%s0] sm:$0xff]
    %v47 = vld [vmem:[#allocation2] sm:$0xff]
    %v48 = vld [vmem:[#allocation2 + $0x8] sm:$0xff]
    %v49 = vld [vmem:[%s2] sm:$0x1]
    %v51 = vperm.slane %v49, 0
    %vm53 = vcmask 130048
    %v55 = vsel %vm53, %v46, 0
    %57 = vmatpush.msra.mxu0 0.0
    %58 = vmatpush.msra.mxu0 0.0
    %59 = vmatpush.msra.mxu0 0.0
    %60 = vmatpush.msra.mxu0 0.0
    %61 = vmatpush.msra.mxu0 0.0
    %62 = vmatpush.msra.mxu0 0.0
    %63 = vmatpush.msra.mxu0 0.0
    %64 = vmatpush.msra.mxu0 0.0
    %65 = vmatpush.msra.mxu0 0.0
    %66 = vmatpush.msra.mxu0 0.0
    %67 = vmatpush.msra.mxu0 0.0
    %68 = vmatpush.msra.mxu0 0.0
    %69 = vmatpush.msra.mxu0 0.0
    %70 = vmatpush.msra.mxu0 0.0
    %71 = vmatpush.msra.mxu0 %v48
    %72 = vmatpush.msra.mxu0 %v47
    %73 = vmatmul.f32.gmra.mxu0 %v55
    %v74 = vpop.f32.mrf.mxu0
    %v75 = vadd.f32 %v51, %v74
    %76 = vdwg.mxu0
    %v77 = vtanh.pop %v75
    %v78 = vld [vmem:[%s3] sm:$0xff]
    %v79 = vld [vmem:[%s3 + $0x8] sm:$0xff]
    %v80 = vld [vmem:[%s3 + $0x10] sm:$0xff]
    %v81 = vld [vmem:[%s3 + $0x18] sm:$0xff]
    %v82 = vld [vmem:[%s4] sm:$0x1]
    %v84 = vperm.slane %v82, 0
    %vm86 = vcmask 261120
    %v88 = vsel %vm86, %v77, 0
    %90 = vmatpush.msra.mxu0 0.0
    %91 = vmatpush.msra.mxu0 0.0
    %92 = vmatpush.msra.mxu0 0.0
    %93 = vmatpush.msra.mxu0 0.0
    %94 = vmatpush.msra.mxu0 0.0
    %95 = vmatpush.msra.mxu0 0.0
    %96 = vmatpush.msra.mxu0 0.0
    %97 = vmatpush.msra.mxu0 0.0
    %98 = vmatpush.msra.mxu0 0.0
    %99 = vmatpush.msra.mxu0 0.0
    %100 = vmatpush.msra.mxu0 0.0
    %101 = vmatpush.msra.mxu0 0.0
    %102 = vmatpush.msra.mxu0 %v81
    %103 = vmatpush.msra.mxu0 %v80
    %104 = vmatpush.msra.mxu0 %v79
    %105 = vmatpush.msra.mxu0 %v78
    %106 = vmatmul.f32.gmra.mxu0 %v88
    %v107 = vpop.f32.mrf.mxu0
    %v108 = vadd.f32 %v84, %v107
    %109 = vdwg.mxu0
    %v110 = vtanh.pop %v108
    %v111 = vld [vmem:[%s5] sm:$0xff]
    %v112 = vld [vmem:[%s5 + $0x8] sm:$0xff]
    %v113 = vld [vmem:[%s5 + $0x10] sm:$0xff]
    %v114 = vld [vmem:[%s5 + $0x18] sm:$0xff]
    %v115 = vld [vmem:[%s6] sm:$0x1]
    %v117 = vperm.slane %v115, 0
    %v120 = vsel %vm86, %v110, 0
    %122 = vmatpush.msra.mxu0 0.0
    %123 = vmatpush.msra.mxu0 0.0
    %124 = vmatpush.msra.mxu0 0.0
    %125 = vmatpush.msra.mxu0 0.0
    %126 = vmatpush.msra.mxu0 0.0
    %127 = vmatpush.msra.mxu0 0.0
    %128 = vmatpush.msra.mxu0 0.0
    %129 = vmatpush.msra.mxu0 0.0
    %130 = vmatpush.msra.mxu0 0.0
    %131 = vmatpush.msra.mxu0 0.0
    %132 = vmatpush.msra.mxu0 0.0
    %133 = vmatpush.msra.mxu0 0.0
    %134 = vmatpush.msra.mxu0 %v114
    %135 = vmatpush.msra.mxu0 %v113
    %136 = vmatpush.msra.mxu0 %v112
    %137 = vmatpush.msra.mxu0 %v111
    %138 = vmatmul.f32.gmra.mxu0 %v120
    %v139 = vpop.f32.mrf.mxu0
    %v140 = vadd.f32 %v117, %v139
    %141 = vdwg.mxu0
    %v142 = vld [vmem:[%s7] sm:$0x1]
    %v143 = vtanh.pop %v140
    %v145 = vperm.slane %v142, 0
    %v147 = vmul.f32 %v145, %v143
    %v148 = vmax.f32 %v140, -20.0
    %v149 = vmin.f32 %v148, 2.0
    %v150 = vmul.f32 %v149, 1.442695
    %v151 = vpow.pop %v150
    %v152 = vlaneseq
    %v153 = vand.u32 %v152, 127
    %vm154 = vcmp.lt.s32.totalorder %v153, 4
    %v155 = vsel %vm154, %v147, %v151
    %vm156 = vcmask 64512
    %157 = vst.msk [vmem:[#allocation5] sm:$0xff] %vm156, %v155
    // Predicated region
    $region38: #{tpu_custom_call.1} parent=1 // pred_check
      _
    $region39: #{tpu_custom_call.1} parent=1 // pred_check_branch
      %159 = sbr.rel (0) target = $region41
    $region40: #{tpu_custom_call.1} parent=1 // pred_region
      %161 = vsyncadd [#allocation4], 0
      %s163 = sshll.u32 [#allocation5], 4
      %s164 = int_to_ptr.vmem [resolvable:$true] %s163
      %s165 = sshll.u32 %s8, 4
      %s166 = int_to_ptr.hbm [resolvable:$true] %s165
      %168 = dma.vmem_to_hbm [thread:$0]  %s164, 128, %s166, [#allocation4]
    $region41: #{tpu_custom_call.1} parent=1 // pred_fallthru
      _
    // Predicated region
    $region42: #{tpu_custom_call.1} parent=1 // pred_check
      _
    $region43: #{tpu_custom_call.1} parent=1 // pred_check_branch
      %170 = sbr.rel (0) target = $region45
    $region44: #{tpu_custom_call.1} parent=1 // pred_region
      %172 = dma.done [#allocation4], 128
    $region45: #{tpu_custom_call.1} parent=1 // pred_fallthru
      _
    %173 = vsyncpa [#allocation3], 1
    %174 = vsyncpa [#allocation4], 1

</llo_original>
